<compile_context>
chip_gen: v7x
topology: tpu7x:2x2x1
jax: 0.10.0
libtpu: 0.0.40
codegen_flags: <defaults>
</compile_context>

<pallas_src>
import functools

import jax
import jax.numpy as jnp
from jax.experimental import pallas as pl
from jax.experimental.pallas import tpu as pltpu


# Conservative VMEM budget for the streamed tiles (2x double-buffered input +
# 2x double-buffered output).  24 MiB fits comfortably on every generation
# (v5e/v6e: 128 MiB physical, v7x: 64 MiB physical), and the measured
# mem-bound plateau (~85% of HBM roofline) is already reached well below it,
# so there is no need to go bigger on the 128 MiB chips.
_TILE_VMEM_BUDGET = 24 * 1024 * 1024
_VMEM_LIMIT_BYTES = 48 * 1024 * 1024  # explicit scoped-VMEM limit (safe on v7x too)


def _round_up(x: int, m: int) -> int:
    return ((x + m - 1) // m) * m


def _choose_row_tile(rows: int, feat_padded: int, itemsize: int) -> int:
    """Pick the largest row tile that fits the VMEM budget (LayerNorm is HBM-bound)."""
    # Sublane packing granularity: 8 rows for 32-bit, 16 for bf16, 32 for int8.
    sub = 8 if itemsize >= 4 else (16 if itemsize == 2 else 32)
    per_row = 4 * feat_padded * itemsize  # double-buffered in + out streams
    tile = max(sub, min(_TILE_VMEM_BUDGET // per_row, 1024))
    tile = (tile // sub) * sub
    if tile >= rows:
        # Single block covering all rows; a full-extent block dim is always legal.
        return rows
    # Prefer an even number of grid steps so v7x's two TensorCores stay balanced
    # (no-op on single-TC v5e/v6e).
    steps = pl.cdiv(rows, tile)
    if steps > 1 and steps % 2 == 1:
        alt = _round_up(pl.cdiv(rows, steps + 1), sub)
        if sub <= alt < tile:
            tile = alt
    return tile


def _layernorm_kernel(x_ref, alpha_ref, bias_ref, o_ref, *,
                      eps: float, feat: int, feat_padded: int):
    # x_ref: (TR, Fp) tile of rows, full (lane-padded) feature axis.
    x = x_ref[...].astype(jnp.float32)

    masked = feat != feat_padded
    if masked:
        col = jax.lax.broadcasted_iota(jnp.int32, x.shape, dimension=1)
        valid = col < feat
        x = jnp.where(valid, x, 0.0)

    inv_f = jnp.float32(1.0 / feat)
    mean = jnp.sum(x, axis=-1, keepdims=True) * inv_f
    diff = x - mean
    if masked:
        diff = jnp.where(valid, diff, 0.0)

    # PyTorch tensor.std() is the *unbiased* estimator (ddof=1).
    inv_fm1 = jnp.float32(1.0 / max(feat - 1, 1))
    var = jnp.sum(diff * diff, axis=-1, keepdims=True) * inv_fm1
    std = jnp.sqrt(var)

    # Per-row reciprocal (TR divides instead of TR*F), then VPU multiplies.
    inv = pl.reciprocal(std + jnp.float32(eps))  # exact; shape (TR, 1)

    alpha = alpha_ref[...].astype(jnp.float32)  # (1, Fp)
    bias = bias_ref[...].astype(jnp.float32)    # (1, Fp)
    y = (diff * inv) * alpha + bias
    o_ref[...] = y.astype(o_ref.dtype)


def pallas_layernorm(x2d, alpha, bias, *, eps: float):
    rows, feat = x2d.shape
    assert feat >= 1

    # Lane-dense feature axis: pad to a multiple of 128 lanes (only needed for
    # small feature sizes; real model widths are already multiples of 128).
    feat_padded = _round_up(feat, 128)
    if feat_padded != feat:
        x2d = jnp.pad(x2d, ((0, 0), (0, feat_padded - feat)))
        alpha = jnp.pad(alpha, (0, feat_padded - feat))
        bias = jnp.pad(bias, (0, feat_padded - feat))
    alpha2d = alpha.reshape(1, feat_padded)
    bias2d = bias.reshape(1, feat_padded)

    itemsize = x2d.dtype.itemsize
    row_tile = _choose_row_tile(rows, feat_padded, itemsize)
    grid = pl.cdiv(rows, row_tile)  # no divisibility requirement: tail block is masked

    kernel = functools.partial(
        _layernorm_kernel, eps=float(eps), feat=feat, feat_padded=feat_padded)

    out = pl.pallas_call(
        kernel,
        out_shape=jax.ShapeDtypeStruct((rows, feat_padded), x2d.dtype),
        grid_spec=pltpu.PrefetchScalarGridSpec(
            num_scalar_prefetch=0,
            grid=(grid,),
            in_specs=[
                pl.BlockSpec((row_tile, feat_padded), lambda i: (i, 0)),
                pl.BlockSpec((1, feat_padded), lambda i: (0, 0)),  # alpha (constant block)
                pl.BlockSpec((1, feat_padded), lambda i: (0, 0)),  # bias  (constant block)
            ],
            out_specs=pl.BlockSpec((row_tile, feat_padded), lambda i: (i, 0)),
        ),
        compiler_params=pltpu.CompilerParams(
            dimension_semantics=("parallel",),
            vmem_limit_bytes=_VMEM_LIMIT_BYTES,
        ),
    )(x2d, alpha2d, bias2d)

    if feat_padded != feat:
        out = out[:, :feat]
    return out


class DecoderPallas:
    """JAX/Pallas port of the PyTorch Decoder (empty layer stack + LayerNorm)."""

    def __init__(self, features: int, eps: float = 1e-6):
        self.features = features
        self.eps = eps
        # Deterministic init, matching nn.Parameter(torch.ones/zeros(features)).
        self.alpha = jnp.ones((features,), dtype=jnp.float32)
        self.bias = jnp.zeros((features,), dtype=jnp.float32)
        self.layers = ()  # TODO(synk): abstract decoder layers -> identity.

    def __call__(self, x, tgt_mask):
        # for layer in self.layers: x = layer(x, tgt_mask)   (empty ModuleList)
        del tgt_mask
        b, s, f = x.shape
        assert f == self.features
        x2d = x.reshape(b * s, f)
        y2d = pallas_layernorm(x2d, self.alpha, self.bias, eps=self.eps)
        return y2d.reshape(b, s, f)


def _reference_layernorm(x, alpha, bias, eps):
    mean = jnp.mean(x, axis=-1, keepdims=True)
    # ddof=1 to match torch's unbiased tensor.std()
    std = jnp.std(x, axis=-1, keepdims=True, ddof=1)
    return alpha * (x - mean) / (std + eps) + bias


if __name__ == "__main__":
    key = jax.random.PRNGKey(0)

    # Case 1: the shapes implied by the module (small, feature axis < 128 ->
    # exercises the lane-padding + masked-reduction path).
    batch, seq, features = 2, 8, 32
    k1, k2 = jax.random.split(key)
    x = jax.random.normal(k1, (batch, seq, features), dtype=jnp.float32)
    tgt_mask = jnp.ones((batch, 1, seq, seq), dtype=jnp.float32)

    decoder = DecoderPallas(features)
    out = jax.block_until_ready(decoder(x, tgt_mask))
    ref = _reference_layernorm(x, decoder.alpha, decoder.bias, decoder.eps)
    assert out.shape == (batch, seq, features)
    assert jnp.allclose(out, ref, atol=1e-5, rtol=1e-5), "mismatch vs reference (case 1)"

    # Case 2: lane-dense feature width (multiple of 128 -> no padding path).
    batch2, seq2, features2 = 2, 64, 256
    x2 = jax.random.normal(k2, (batch2, seq2, features2), dtype=jnp.float32)
    mask2 = jnp.ones((batch2, 1, seq2, seq2), dtype=jnp.float32)
    decoder2 = DecoderPallas(features2)
    out2 = jax.block_until_ready(decoder2(x2, mask2))
    ref2 = _reference_layernorm(x2, decoder2.alpha, decoder2.bias, decoder2.eps)
    assert out2.shape == (batch2, seq2, features2)
    assert jnp.allclose(out2, ref2, atol=1e-5, rtol=1e-5), "mismatch vs reference (case 2)"

    print("KERNEL_OK")
</pallas_src>

<mosaic_0001>
module attributes {stable_mosaic.version = 11 : i64} {
  func.func @_layernorm_kernel(%arg0: i32, %arg1: memref<16x128xf32, #tpu.memory_space<vmem>>, %arg2: memref<1x128xf32, #tpu.memory_space<vmem>>, %arg3: memref<1x128xf32, #tpu.memory_space<vmem>>, %arg4: memref<16x128xf32, #tpu.memory_space<vmem>>) attributes {dimension_semantics = [#tpu.dimension_semantics<parallel>], iteration_bounds = array<i64: 1>, scalar_prefetch = 0 : i64, scratch_operands = 0 : i64, tpu.core_type = #tpu.core_type<tc>, window_params = [{transform_indices = @transform_0, window_bounds = array<i64: 16, 128>}, {pipeline_mode = #tpu.pipeline_mode<synchronous>, transform_indices = @transform_1, window_bounds = array<i64: 1, 128>}, {pipeline_mode = #tpu.pipeline_mode<synchronous>, transform_indices = @transform_2, window_bounds = array<i64: 1, 128>}, {transform_indices = @transform_3, window_bounds = array<i64: 16, 128>}]} {
    %c0 = arith.constant 0 : index
    %c0_0 = arith.constant 0 : index
    %0 = vector.load %arg1[%c0, %c0_0] : memref<16x128xf32, #tpu.memory_space<vmem>>, vector<16x128xf32>
    %1 = tpu.iota {dimensions = array<i32: 1>} : vector<16x128xi32>
    %c32_i32 = arith.constant 32 : i32
    %2 = vector.broadcast %c32_i32 : i32 to vector<16x128xi32>
    %3 = arith.cmpi slt, %1, %2 : vector<16x128xi32>
    %cst = arith.constant 0.000000e+00 : f32
    %4 = vector.broadcast %cst : f32 to vector<16x128xf32>
    %5 = arith.select %3, %0, %4 : vector<16x128xi1>, vector<16x128xf32>
    %cst_1 = arith.constant dense<0.000000e+00> : vector<16xf32>
    %6 = vector.multi_reduction <add>, %5, %cst_1 [1] : vector<16x128xf32> to vector<16xf32>
    %7 = vector.shape_cast %6 : vector<16xf32> to vector<16x1xf32>
    %cst_2 = arith.constant 3.125000e-02 : f32
    %8 = vector.broadcast %cst_2 : f32 to vector<16x1xf32>
    %9 = arith.mulf %7, %8 : vector<16x1xf32>
    %10 = vector.broadcast %9 : vector<16x1xf32> to vector<16x128xf32>
    %11 = arith.subf %5, %10 : vector<16x128xf32>
    %cst_3 = arith.constant 0.000000e+00 : f32
    %12 = vector.broadcast %cst_3 : f32 to vector<16x128xf32>
    %13 = arith.select %3, %11, %12 : vector<16x128xi1>, vector<16x128xf32>
    %14 = arith.mulf %13, %13 : vector<16x128xf32>
    %cst_4 = arith.constant dense<0.000000e+00> : vector<16xf32>
    %15 = vector.multi_reduction <add>, %14, %cst_4 [1] : vector<16x128xf32> to vector<16xf32>
    %16 = vector.shape_cast %15 : vector<16xf32> to vector<16x1xf32>
    %cst_5 = arith.constant 0.0322580636 : f32
    %17 = vector.broadcast %cst_5 : f32 to vector<16x1xf32>
    %18 = arith.mulf %16, %17 : vector<16x1xf32>
    %19 = math.sqrt %18 : vector<16x1xf32>
    %cst_6 = arith.constant 9.99999997E-7 : f32
    %20 = vector.broadcast %cst_6 : f32 to vector<16x1xf32>
    %21 = arith.addf %19, %20 : vector<16x1xf32>
    %22 = tpu.reciprocal %21 : vector<16x1xf32> -> vector<16x1xf32>
    %c0_7 = arith.constant 0 : index
    %c0_8 = arith.constant 0 : index
    %23 = vector.load %arg2[%c0_7, %c0_8] : memref<1x128xf32, #tpu.memory_space<vmem>>, vector<1x128xf32>
    %c0_9 = arith.constant 0 : index
    %c0_10 = arith.constant 0 : index
    %24 = vector.load %arg3[%c0_9, %c0_10] : memref<1x128xf32, #tpu.memory_space<vmem>>, vector<1x128xf32>
    %25 = vector.broadcast %22 : vector<16x1xf32> to vector<16x128xf32>
    %26 = arith.mulf %13, %25 : vector<16x128xf32>
    %27 = vector.broadcast %23 : vector<1x128xf32> to vector<16x128xf32>
    %28 = arith.mulf %26, %27 : vector<16x128xf32>
    %29 = vector.broadcast %24 : vector<1x128xf32> to vector<16x128xf32>
    %30 = arith.addf %28, %29 : vector<16x128xf32>
    %c0_11 = arith.constant 0 : index
    %c0_12 = arith.constant 0 : index
    %31 = vector.load %arg4[%c0_11, %c0_12] : memref<16x128xf32, #tpu.memory_space<vmem>>, vector<16x128xf32>
    tpu.vector_store %arg4[%c0_11, %c0_12], %30 {strides = array<i32>} : memref<16x128xf32, #tpu.memory_space<vmem>>, vector<16x128xf32>,
    return
  }
  func.func @transform_0(%arg0: i32) -> (i32, i32) {
    %c0_i32 = arith.constant 0 : i32
    %c0_i32_0 = arith.constant 0 : i32
    return %arg0, %c0_i32 : i32, i32
  }
  func.func @transform_1(%arg0: i32) -> (i32, i32) {
    %c0_i32 = arith.constant 0 : i32
    %c0_i32_0 = arith.constant 0 : i32
    %c0_i32_1 = arith.constant 0 : i32
    return %c0_i32, %c0_i32_0 : i32, i32
  }
  func.func @transform_2(%arg0: i32) -> (i32, i32) {
    %c0_i32 = arith.constant 0 : i32
    %c0_i32_0 = arith.constant 0 : i32
    %c0_i32_1 = arith.constant 0 : i32
    return %c0_i32, %c0_i32_0 : i32, i32
  }
  func.func @transform_3(%arg0: i32) -> (i32, i32) {
    %c0_i32 = arith.constant 0 : i32
    %c0_i32_0 = arith.constant 0 : i32
    return %arg0, %c0_i32 : i32, i32
  }
}

</mosaic_0001>

<llo_original>
// kernel: tpu_custom_call.1
$region0: #{tpu_custom_call.1}
  #allocation0 [shape = 'u32[]', space=smem, size = 0x4, offset = 0x4, fixed_abs, tag = 'smem constant byte address 0x4 - core index']
  #allocation1 [shape = 'u32[144,128]{1,0:T(1,128)}', space=vmem, size = 0x12000, scoped, tag = 'internal scratch']
  %s0 = inlined_call_operand.hbm [shape: f32[16,128], index: 0, kind: input, shape index: {}]
  %s1 = inlined_call_operand.vmem [shape: f32[1,128], index: 1, kind: input, shape index: {}]
  %s2 = inlined_call_operand.vmem [shape: f32[1,128], index: 2, kind: input, shape index: {}]
  %s3 = inlined_call_operand.hbm [shape: f32[16,128], index: 3, kind: output, shape index: {}]
  %s4 = sld [smem:[#allocation0]]
  $region26: #{tpu_custom_call.1} parent=0
    _
  %s6 = ssub.s32 1, %s4
  %s7 = scalar_select 0, %s6, %s4
  $region1: #{tpu_custom_call.1} parent=0
    #allocation2 [shape = 'u8[8192]{0}', space=vmem, size = 0x2000, scoped, tag = 'input window, operand 0, single buffered']
    #allocation3 [shape = 's32[1]{0}', space=sflag, size = 0x4, scoped, tag = 'scoped memory for tpu_custom_call.1']
    #allocation4 [shape = 's32[1]{0}', space=sflag, size = 0x4, scoped, tag = 'scoped memory for tpu_custom_call.1']
    #allocation5 [shape = 'u8[8192]{0}', space=vmem, size = 0x2000, scoped, tag = 'output window, operand 0, single buffered']
    %8 = vsyncpa [#allocation3], 0
    %9 = vsyncpa [#allocation4], 0
    // Predicated region
    $region2: #{tpu_custom_call.1} parent=1 // pred_check
      _
    $region3: #{tpu_custom_call.1} parent=1 // pred_check_branch
      %11 = sbr.rel (0) target = $region5
    $region4: #{tpu_custom_call.1} parent=1 // pred_region
      %s13 = ssub.s32 256, 256
      %14 = vsyncadd [#allocation3], %s13
      %s15 = sshll.u32 [#allocation2], 4
      %s16 = int_to_ptr.vmem [resolvable:$true] %s15
      %21 = dma.hbm_to_vmem [thread:$0]  %s0, 256, %s16, [#allocation3], 128, 128, 8
    $region5: #{tpu_custom_call.1} parent=1 // pred_fallthru
      _
    // Predicated region
    $region6: #{tpu_custom_call.1} parent=1 // pred_check
      _
    $region7: #{tpu_custom_call.1} parent=1 // pred_check_branch
      %23 = sbr.rel (0) target = $region9
    $region8: #{tpu_custom_call.1} parent=1 // pred_region
      _
    $region9: #{tpu_custom_call.1} parent=1 // pred_fallthru
      _
    // Predicated region
    $region10: #{tpu_custom_call.1} parent=1 // pred_check
      _
    $region11: #{tpu_custom_call.1} parent=1 // pred_check_branch
      %25 = sbr.rel (0) target = $region13
    $region12: #{tpu_custom_call.1} parent=1 // pred_region
      _
    $region13: #{tpu_custom_call.1} parent=1 // pred_fallthru
      _
    // Predicated region
    $region14: #{tpu_custom_call.1} parent=1 // pred_check
      _
    $region15: #{tpu_custom_call.1} parent=1 // pred_check_branch
      %27 = sbr.rel (0) target = $region17
    $region16: #{tpu_custom_call.1} parent=1 // pred_region
      %28 = dma.done [#allocation3], 256
    $region17: #{tpu_custom_call.1} parent=1 // pred_fallthru
      _
    %v29 = vld [vmem:[#allocation2] sm:$0xff]
    %v30 = vld [vmem:[#allocation2 + $0x8] sm:$0xff]
    %v31 = vlaneseq
    %v32 = vand.u32 %v31, 127
    %vm33 = vcmp.lt.s32.totalorder %v32, 32
    %v34 = vsel %vm33, %v29, 0.0
    %v35 = vsel %vm33, %v30, 0.0
    %36 = vadd.xlane.f32.xlu0 %v34
    %v37 = vpop.xlane.xlu0 %36
    %38 = vadd.xlane.f32.xlu0 %v35
    %v39 = vpop.xlane.xlu0 %38
    %v40 = vmul.f32 %v37, 0.03125
    %v41 = vmul.f32 %v39, 0.03125
    %v42 = vsub.f32 %v34, %v40
    %v43 = vsub.f32 %v35, %v41
    %v44 = vsel %vm33, %v42, 0.0
    %v45 = vsel %vm33, %v43, 0.0
    %v46 = vmul.f32 %v44, %v44
    %v47 = vmul.f32 %v45, %v45
    %48 = vadd.xlane.f32.xlu0 %v46
    %v49 = vpop.xlane.xlu0 %48
    %50 = vadd.xlane.f32.xlu0 %v47
    %v51 = vpop.xlane.xlu0 %50
    %v52 = vmul.f32 %v49, 0.032258064
    %v53 = vmul.f32 %v51, 0.032258064
    %v54 = vrsqrt.pop %v52
    %v55 = vmul.f32 %v52, %v54
    %vm56 = vcmp.eq.f32.partialorder %v52, inf
    %v57 = vsel %vm56, %v52, %v55
    %vm58 = vcmp.eq.f32.partialorder %v52, 0.0
    %v59 = vand.u32 %v52, 2147483648
    %v60 = vsel %vm58, %v59, %v57
    %v61 = vrsqrt.pop %v53
    %v62 = vmul.f32 %v53, %v61
    %vm63 = vcmp.eq.f32.partialorder %v53, inf
    %v64 = vsel %vm63, %v53, %v62
    %vm65 = vcmp.eq.f32.partialorder %v53, 0.0
    %v66 = vand.u32 %v53, 2147483648
    %v67 = vsel %vm65, %v66, %v64
    %v68 = vadd.f32 %v60, 1e-06
    %v69 = vadd.f32 %v67, 1e-06
    %v70 = vrcp.pop %v68
    %v71 = vrcp.pop %v69
    %v72 = vld [vmem:[%s1] sm:$0x1]
    %v73 = vld [vmem:[%s2] sm:$0x1]
    %v74 = vmul.f32 %v44, %v70
    %v75 = vmul.f32 %v45, %v71
    %v77 = vlaneseq
    %v78 = vshrl.u32 %v77, 7
    %v79 = vsub.s32 0, %v78
    %v80 = vrot.slane %v72, %v79
    %v82 = vmul.f32 %v74, %v80
    %v83 = vmul.f32 %v75, %v80
    %v85 = vlaneseq
    %v86 = vshrl.u32 %v85, 7
    %v87 = vsub.s32 0, %v86
    %v88 = vrot.slane %v73, %v87
    %v90 = vadd.f32 %v82, %v88
    %v91 = vadd.f32 %v83, %v88
    %92 = vst [vmem:[#allocation5] sm:$0xff] %v90
    %93 = vst [vmem:[#allocation5 + $0x8] sm:$0xff] %v91
    // Predicated region
    $region18: #{tpu_custom_call.1} parent=1 // pred_check
      _
    $region19: #{tpu_custom_call.1} parent=1 // pred_check_branch
      %95 = sbr.rel (0) target = $region21
    $region20: #{tpu_custom_call.1} parent=1 // pred_region
      %s97 = ssub.s32 256, 256
      %98 = vsyncadd [#allocation4], %s97
      %s99 = sshll.u32 [#allocation5], 4
      %s100 = int_to_ptr.vmem [resolvable:$true] %s99
      %105 = dma.vmem_to_hbm [thread:$0]  %s100, 256, %s3, [#allocation4], 128, 128, 8
    $region21: #{tpu_custom_call.1} parent=1 // pred_fallthru
      _
    // Predicated region
    $region22: #{tpu_custom_call.1} parent=1 // pred_check
      _
    $region23: #{tpu_custom_call.1} parent=1 // pred_check_branch
      %107 = sbr.rel (0) target = $region25
    $region24: #{tpu_custom_call.1} parent=1 // pred_region
      %108 = dma.done [#allocation4], 256
    $region25: #{tpu_custom_call.1} parent=1 // pred_fallthru
      _
    %109 = vsyncpa [#allocation3], 1
    %110 = vsyncpa [#allocation4], 1

</llo_original>
